<compile_context>
chip_gen: v7x
topology: tpu7x:2x2x1
jax: 0.10.0
libtpu: 0.0.40
codegen_flags: <defaults>
</compile_context>

<pallas_src>
import numpy as np
import jax
import jax.numpy as jnp
from jax.experimental import pallas as pl
from jax.experimental.pallas import tpu as pltpu

# ----------------------------- synthetic HParams ------------------------------
NUM_MELS = 32
VOCODER_EXTRA_DIM = 8
VOC_IN_DIM = NUM_MELS + VOCODER_EXTRA_DIM          # 40
LATENT_DIM = 16
N_FFT = 256
HOP = 128                                          # N_FFT == 2 * HOP (used by framing)
NB = N_FFT // 2                                    # 128 DFT bins (Nyquist bin dropped)


# ----------------------------- helpers from source ----------------------------
def _maybe(fn):
    def _fn(*args):
        if args[0] is None:
            return None
        return fn(*args)
    return _fn


def normalize_wav(x):
    # x / (|x|.max(-1, keepdim) + 1e-7). Plain XLA: this op is trivially HBM-roofline, so
    # no Pallas kernel (per perf review; a single-block kernel also doesn't scale with T).
    return x / (jnp.max(jnp.abs(x), axis=-1, keepdims=True) + 1e-7)


# ----------------------------- fused Enhancer kernel --------------------------
def _enhancer_kernel(x_ref, bnd_ref, s2_ref, dft_ref, fb_ref,
                     encw_ref, encb_ref, head_ref, o_ref):
    tf = x_ref.shape[1]

    # hi half of frame f is wav chunk f; lo half is chunk f-1 (STFT centre zero padding is
    # the boundary row of tile 0). bnd_ref carries chunk (tile_start - 1).
    hi = x_ref[0]                                              # (TF, HOP) bf16
    bnd = bnd_ref[0, 0]                                        # (1, HOP)  bf16
    if tf > 1:
        lo = jnp.concatenate([bnd, hi[:tf - 1, :]], axis=0)    # (TF, HOP)
    else:
        lo = bnd
    frames = jnp.concatenate([lo, hi], axis=-1)                # (TF, 2*HOP) bf16

    # Hann-windowed DFT: one K=256 MXU matmul against the packed [Re | Im] basis.
    proj = jnp.dot(frames, dft_ref[...], preferred_element_type=jnp.float32)   # (TF, 2*NB)
    re = proj[:, :NB]
    im = proj[:, NB:]
    # _normalize_wav folded: power of the normalized wav == scale^2 * power of the raw wav.
    power = (re * re + im * im) * s2_ref[0]                    # (TF, NB) f32

    # mel filterbank + log, Normalizer+IRMAE encoder (affine folded), decoder@vocoder head.
    mel = jnp.log(jnp.dot(power.astype(jnp.bfloat16), fb_ref[...],
                          preferred_element_type=jnp.float32) + 1e-5)           # (TF, NUM_MELS)
    z = jnp.tanh(jnp.dot(mel.astype(jnp.bfloat16), encw_ref[...],
                         preferred_element_type=jnp.float32) + encb_ref[...])   # (TF, LATENT)
    o_ref[0] = jnp.tanh(jnp.dot(z.astype(jnp.bfloat16), head_ref[...],
                                preferred_element_type=jnp.float32)
                        ).astype(o_ref.dtype)                                   # (TF, HOP)


def fused_enhancer(x, params, *, tf_frames=512):
    """x: (B, T) raw wav -> (B, F, HOP) reconstructed wav frames, F = T // HOP."""
    B, T = x.shape
    F = T // HOP
    assert F >= 1, "wav too short"
    # Frame-tile size: whole row when short, else a multiple of 16 frames (bf16 sublanes).
    # TODO(synk): on v5e/v6e (128 MiB VMEM) tf_frames can be raised (1024-2048) to amortize
    # per-grid-step overhead; keep <= ~512 on v7x (64 MiB VMEM).
    TF = F if F <= tf_frames else (tf_frames // 16) * 16
    NT = pl.cdiv(F, TF)

    # Per-batch wav-normalization scale (reference: x / (max|x| + 1e-7)) over the FULL wav,
    # folded into the power spectrum as scale^2; broadcast over 128 lanes so the kernel
    # applies it as a plain VPU multiply with no scalar extraction.
    xf = x.astype(jnp.float32)
    scale = 1.0 / (jnp.max(jnp.abs(xf), axis=-1) + 1e-7)                       # (B,)
    s2 = jnp.broadcast_to((scale * scale)[:, None, None], (B, 1, HOP))

    # Hop-chunk view of the wav (bf16 halves kernel-side HBM traffic; the cast fuses with
    # the abs-max read). No centre-pad copy: frame f = chunk[f-1] ++ chunk[f].
    x16 = x[:, :F * HOP].astype(jnp.bfloat16).reshape(B, F, HOP)

    # One boundary chunk per frame tile: chunk (t*TF - 1); zeros for tile 0 (= STFT centre
    # zero padding). Negligible traffic (NT rows per batch).
    zero_row = jnp.zeros((B, 1, HOP), jnp.bfloat16)
    if NT > 1:
        bnd = jnp.concatenate([zero_row, x16[:, TF - 1:(NT - 1) * TF:TF, :]], axis=1)
    else:
        bnd = zero_row
    bnd = bnd.reshape(B, NT, 1, HOP)

    flops_per_frame = (2 * (2 * HOP) * (2 * NB) + 4 * NB + 2 * NB * NUM_MELS
                       + 2 * NUM_MELS * LATENT_DIM + 2 * LATENT_DIM * HOP)
    weight_bytes = 2 * (2 * HOP * 2 * NB + NB * NUM_MELS
                        + NUM_MELS * LATENT_DIM + LATENT_DIM * HOP) + 4 * LATENT_DIM
    cost = pl.CostEstimate(
        flops=B * F * flops_per_frame,
        transcendentals=B * F * (NUM_MELS + LATENT_DIM + HOP),
        bytes_accessed=B * F * HOP * (2 + 4) + B * NT * HOP * 2 + B * HOP * 4 + weight_bytes,
    )

    return pl.pallas_call(
        _enhancer_kernel,
        out_shape=jax.ShapeDtypeStruct((B, F, HOP), jnp.float32),
        grid=(B, NT),
        in_specs=[
            pl.BlockSpec((1, TF, HOP), lambda b, t: (b, t, 0)),         # wav chunks, tile t
            pl.BlockSpec((1, 1, 1, HOP), lambda b, t: (b, t, 0, 0)),    # tile boundary chunk
            pl.BlockSpec((1, 1, HOP), lambda b, t: (b, 0, 0)),          # scale^2 (lane bcast)
            pl.BlockSpec((2 * HOP, 2 * NB), lambda b, t: (0, 0)),       # packed [Re|Im] DFT
            pl.BlockSpec((NB, NUM_MELS), lambda b, t: (0, 0)),          # mel filterbank
            pl.BlockSpec((NUM_MELS, LATENT_DIM), lambda b, t: (0, 0)),  # folded norm+encoder
            pl.BlockSpec((1, LATENT_DIM), lambda b, t: (0, 0)),         # folded encoder bias
            pl.BlockSpec((LATENT_DIM, HOP), lambda b, t: (0, 0)),       # folded dec@voc head
        ],
        out_specs=pl.BlockSpec((1, TF, HOP), lambda b, t: (b, t, 0)),
        compiler_params=pltpu.CompilerParams(
            dimension_semantics=("parallel", "parallel"),
            vmem_limit_bytes=32 * 1024 * 1024,
        ),
        cost_estimate=cost,
    )(x16, bnd, s2, params["dft"], params["fb"], params["enc_w"],
      params["enc_b"], params["head"])


# ----------------------------- parameter construction --------------------------
def make_filterbank():
    # TODO(synk): true HTK mel scale of MelSpectrogram(hp) not given; use a linear-
    # frequency triangular filterbank (same shape / nonnegativity semantics).
    edges = np.linspace(0.0, NB - 1, NUM_MELS + 2)
    fb = np.zeros((NB, NUM_MELS), np.float32)
    bins = np.arange(NB, dtype=np.float32)
    for m in range(NUM_MELS):
        l, c, r = edges[m], edges[m + 1], edges[m + 2]
        up = (bins - l) / max(c - l, 1e-5)
        down = (r - bins) / max(r - c, 1e-5)
        fb[:, m] = np.clip(np.minimum(up, down), 0.0, None)
    return fb


def init_params():
    # Hann-windowed real-DFT bases, packed [Re | Im] over 2*NB = 256 lanes (Nyquist bin
    # dropped). Row order is the frame sample order [lo half | hi half], matching the
    # kernel's lane-concatenated operand, so one K=256 matmul covers both half-frames.
    # TODO(synk): reference torch.stft uses reflect-mode centre padding; zero padding
    # stands in here (MelSpectrogram source not given).
    n = np.arange(N_FFT)[:, None]
    k = np.arange(NB)[None, :]
    win = 0.5 - 0.5 * np.cos(2 * np.pi * np.arange(N_FFT) / N_FFT)
    ang = 2.0 * np.pi * n * k / N_FFT
    cos_b = win[:, None] * np.cos(ang)
    sin_b = -win[:, None] * np.sin(ang)
    dft = np.concatenate([cos_b, sin_b], axis=1).astype(np.float32)   # (256, 256)

    fb = make_filterbank()

    key = jax.random.PRNGKey(1234)
    k1, k2, k3 = jax.random.split(key, 3)
    enc_w = jax.random.normal(k1, (NUM_MELS, LATENT_DIM), jnp.float32) * 0.1
    dec_w = jax.random.normal(k2, (LATENT_DIM, VOC_IN_DIM), jnp.float32) * 0.1
    voc_w = jax.random.normal(k3, (VOC_IN_DIM, HOP), jnp.float32) * 0.05
    mu = jnp.linspace(-1.0, 1.0, NUM_MELS, dtype=jnp.float32)[None, :]
    sig = jnp.full((1, NUM_MELS), 2.0, jnp.float32)

    # Fold the per-channel Normalizer affine into the encoder (exact):
    #   ((mel - mu) / (sig + eps)) @ enc_w == mel @ enc_w' + enc_b
    inv_sig = 1.0 / (sig + 1e-7)
    enc_w_folded = enc_w * inv_sig.T                                  # (NUM_MELS, LATENT)
    enc_b = -jnp.dot(mu * inv_sig, enc_w)                             # (1, LATENT)

    # Fold IRMAE decoder into the vocoder head (exact: no nonlinearity in between).
    head = jnp.dot(dec_w, voc_w)                                      # (LATENT, HOP)

    bf = lambda a: jnp.asarray(a, jnp.bfloat16)
    return dict(
        dft=bf(dft), fb=bf(fb),
        enc_w=bf(enc_w_folded), enc_b=jnp.asarray(enc_b, jnp.float32),
        head=bf(head),
    )


# ----------------------------- Enhancer.forward --------------------------------
def enhancer_forward(params, x, y=None, z=None):
    """
    Args:  x: (b, t) mix wavs;  y, z: optional (b, t) wavs.
    Returns: o: (b, t') reconstructed wav, t' = (t // HOP) * HOP.
    """
    assert x.ndim == 2, f"Expected (b t), got {x.shape}"
    assert y is None or y.ndim == 2

    # x's _normalize_wav is folded into the fused kernel (scale^2 in the power domain);
    # optional y / z use the plain-jnp helper.
    y = _maybe(normalize_wav)(y)
    z = _maybe(normalize_wav)(z)
    _ = _maybe(lambda w: w)(y)     # y_mel / Normalizer(y_mel): unused in eval / non-'cfm' mode
    # TODO(synk): the 'cfm' training branch (Beta(0.2,0.2) lambd mixing + denoiser) and the
    # CFM ODE solver have no source here; only the eval lambd == 0 identity path
    # (x_mel_denoised == x_mel_original) is realized.

    wav_frames = fused_enhancer(x, params)                            # (B, F, HOP)
    B, T = x.shape
    return wav_frames.reshape(B, (T // HOP) * HOP)


# ----------------------------- pure-jnp reference ------------------------------
def _reference_forward(params, x):
    # Mirror of the fused pipeline (same bf16 casts) used only for validation in __main__.
    B, T = x.shape
    F = T // HOP
    scale = 1.0 / (jnp.max(jnp.abs(x.astype(jnp.float32)), axis=-1, keepdims=True) + 1e-7)
    xl = x[:, :F * HOP].astype(jnp.bfloat16).reshape(B, F, HOP)
    lo = jnp.concatenate([jnp.zeros((B, 1, HOP), jnp.bfloat16), xl[:, :F - 1]], axis=1)
    frames = jnp.concatenate([lo, xl], axis=-1)                                  # (B, F, 256)
    proj = jnp.einsum("bfk,kn->bfn", frames, params["dft"],
                      preferred_element_type=jnp.float32)
    re, im = proj[..., :NB], proj[..., NB:]
    power = (re * re + im * im) * (scale * scale)[..., None]
    mel = jnp.log(jnp.einsum("bfn,nm->bfm", power.astype(jnp.bfloat16), params["fb"],
                             preferred_element_type=jnp.float32) + 1e-5)
    zz = jnp.tanh(jnp.einsum("bfm,ml->bfl", mel.astype(jnp.bfloat16), params["enc_w"],
                             preferred_element_type=jnp.float32) + params["enc_b"])
    wav = jnp.tanh(jnp.einsum("bfl,lh->bfh", zz.astype(jnp.bfloat16), params["head"],
                              preferred_element_type=jnp.float32))
    return wav.reshape(B, F * HOP)


# ----------------------------- main --------------------------------------------
if __name__ == "__main__":
    key = jax.random.PRNGKey(0)
    B, T = 2, 2048
    x = jax.random.normal(key, (B, T), jnp.float32)

    params = init_params()
    fwd = jax.jit(lambda p, xx: enhancer_forward(p, xx, None, None))
    o = fwd(params, x)
    jax.block_until_ready(o)

    assert o.shape == (B, (T // HOP) * HOP) == (B, T)
    assert bool(jnp.all(jnp.isfinite(o)))

    ref = _reference_forward(params, x)
    err = float(jnp.max(jnp.abs(o - ref)))
    assert err < 5e-2, f"mismatch vs jnp reference: {err}"

    print("KERNEL_OK")
</pallas_src>

<mosaic_0001>
module attributes {stable_mosaic.version = 11 : i64} {
  func.func @_enhancer_kernel(%arg0: i32, %arg1: i32, %arg2: memref<1x16x128xbf16, #tpu.memory_space<vmem>>, %arg3: memref<1x1x1x128xbf16, #tpu.memory_space<vmem>>, %arg4: memref<1x1x128xf32, #tpu.memory_space<vmem>>, %arg5: memref<256x256xbf16, #tpu.memory_space<vmem>>, %arg6: memref<128x32xbf16, #tpu.memory_space<vmem>>, %arg7: memref<32x16xbf16, #tpu.memory_space<vmem>>, %arg8: memref<1x16xf32, #tpu.memory_space<vmem>>, %arg9: memref<16x128xbf16, #tpu.memory_space<vmem>>, %arg10: memref<1x16x128xf32, #tpu.memory_space<vmem>>) attributes {dimension_semantics = [#tpu.dimension_semantics<parallel>, #tpu.dimension_semantics<parallel>], iteration_bounds = array<i64: 2, 1>, scalar_prefetch = 0 : i64, scratch_operands = 0 : i64, tpu.core_type = #tpu.core_type<tc>, window_params = [{transform_indices = @transform_0, window_bounds = array<i64: 1, 16, 128>}, {transform_indices = @transform_1, window_bounds = array<i64: 1, 1, 1, 128>}, {transform_indices = @transform_2, window_bounds = array<i64: 1, 1, 128>}, {pipeline_mode = #tpu.pipeline_mode<synchronous>, transform_indices = @transform_3, window_bounds = array<i64: 256, 256>}, {pipeline_mode = #tpu.pipeline_mode<synchronous>, transform_indices = @transform_4, window_bounds = array<i64: 128, 32>}, {pipeline_mode = #tpu.pipeline_mode<synchronous>, transform_indices = @transform_5, window_bounds = array<i64: 32, 16>}, {pipeline_mode = #tpu.pipeline_mode<synchronous>, transform_indices = @transform_6, window_bounds = array<i64: 1, 16>}, {pipeline_mode = #tpu.pipeline_mode<synchronous>, transform_indices = @transform_7, window_bounds = array<i64: 16, 128>}, {transform_indices = @transform_8, window_bounds = array<i64: 1, 16, 128>}]} {
    %c0 = arith.constant 0 : index
    %c0_0 = arith.constant 0 : index
    %c0_1 = arith.constant 0 : index
    %0 = vector.load %arg2[%c0, %c0_0, %c0_1] : memref<1x16x128xbf16, #tpu.memory_space<vmem>>, vector<1x16x128xbf16>
    %1 = vector.shape_cast %0 : vector<1x16x128xbf16> to vector<16x128xbf16>
    %c0_2 = arith.constant 0 : index
    %c0_3 = arith.constant 0 : index
    %c0_4 = arith.constant 0 : index
    %c0_5 = arith.constant 0 : index
    %2 = vector.load %arg3[%c0_2, %c0_3, %c0_4, %c0_5] : memref<1x1x1x128xbf16, #tpu.memory_space<vmem>>, vector<1x1x1x128xbf16>
    %3 = vector.shape_cast %2 : vector<1x1x1x128xbf16> to vector<1x128xbf16>
    %4 = vector.extract_strided_slice %1 {offsets = [0, 0], sizes = [15, 128], strides = [1, 1]} : vector<16x128xbf16> to vector<15x128xbf16>
    %5 = tpu.concatenate %3, %4 in 0 : vector<1x128xbf16>, vector<15x128xbf16> -> vector<16x128xbf16>
    %6 = tpu.concatenate %5, %1 in 1 : vector<16x128xbf16>, vector<16x128xbf16> -> vector<16x256xbf16>
    %c0_6 = arith.constant 0 : index
    %c0_7 = arith.constant 0 : index
    %7 = vector.load %arg5[%c0_6, %c0_7] : memref<256x256xbf16, #tpu.memory_space<vmem>>, vector<256x256xbf16>
    %cst = arith.constant dense<0.000000e+00> : vector<16x256xf32>
    %8 = tpu.matmul %6, %7, %cst {dimension_numbers = #tpu.dot_dimension_numbers<[1], [0], [0], [1], [0, 0, 1, 1], [], []>} : vector<16x256xbf16>, vector<256x256xbf16>, vector<16x256xf32> -> vector<16x256xf32>
    %9 = vector.extract_strided_slice %8 {offsets = [0, 0], sizes = [16, 128], strides = [1, 1]} : vector<16x256xf32> to vector<16x128xf32>
    %10 = vector.extract_strided_slice %8 {offsets = [0, 128], sizes = [16, 128], strides = [1, 1]} : vector<16x256xf32> to vector<16x128xf32>
    %11 = arith.mulf %9, %9 : vector<16x128xf32>
    %12 = arith.mulf %10, %10 : vector<16x128xf32>
    %13 = arith.addf %11, %12 : vector<16x128xf32>
    %c0_8 = arith.constant 0 : index
    %c0_9 = arith.constant 0 : index
    %c0_10 = arith.constant 0 : index
    %14 = vector.load %arg4[%c0_8, %c0_9, %c0_10] : memref<1x1x128xf32, #tpu.memory_space<vmem>>, vector<1x1x128xf32>
    %15 = vector.shape_cast %14 : vector<1x1x128xf32> to vector<1x128xf32>
    %16 = vector.broadcast %15 : vector<1x128xf32> to vector<16x128xf32>
    %17 = arith.mulf %13, %16 : vector<16x128xf32>
    %18 = arith.truncf %17 : vector<16x128xf32> to vector<16x128xbf16>
    %c0_11 = arith.constant 0 : index
    %c0_12 = arith.constant 0 : index
    %19 = vector.load %arg6[%c0_11, %c0_12] : memref<128x32xbf16, #tpu.memory_space<vmem>>, vector<128x32xbf16>
    %cst_13 = arith.constant dense<0.000000e+00> : vector<16x32xf32>
    %20 = tpu.matmul %18, %19, %cst_13 {dimension_numbers = #tpu.dot_dimension_numbers<[1], [0], [0], [1], [0, 0, 1, 1], [], []>} : vector<16x128xbf16>, vector<128x32xbf16>, vector<16x32xf32> -> vector<16x32xf32>
    %cst_14 = arith.constant 9.99999974E-6 : f32
    %21 = vector.broadcast %cst_14 : f32 to vector<16x32xf32>
    %22 = arith.addf %20, %21 : vector<16x32xf32>
    %23 = math.log %22 : vector<16x32xf32>
    %24 = arith.truncf %23 : vector<16x32xf32> to vector<16x32xbf16>
    %c0_15 = arith.constant 0 : index
    %c0_16 = arith.constant 0 : index
    %25 = vector.load %arg7[%c0_15, %c0_16] : memref<32x16xbf16, #tpu.memory_space<vmem>>, vector<32x16xbf16>
    %cst_17 = arith.constant dense<0.000000e+00> : vector<16x16xf32>
    %26 = tpu.matmul %24, %25, %cst_17 {dimension_numbers = #tpu.dot_dimension_numbers<[1], [0], [0], [1], [0, 0, 1, 1], [], []>} : vector<16x32xbf16>, vector<32x16xbf16>, vector<16x16xf32> -> vector<16x16xf32>
    %c0_18 = arith.constant 0 : index
    %c0_19 = arith.constant 0 : index
    %27 = vector.load %arg8[%c0_18, %c0_19] : memref<1x16xf32, #tpu.memory_space<vmem>>, vector<1x16xf32>
    %28 = vector.broadcast %27 : vector<1x16xf32> to vector<16x16xf32>
    %29 = arith.addf %26, %28 : vector<16x16xf32>
    %30 = math.tanh %29 : vector<16x16xf32>
    %31 = arith.truncf %30 : vector<16x16xf32> to vector<16x16xbf16>
    %c0_20 = arith.constant 0 : index
    %c0_21 = arith.constant 0 : index
    %32 = vector.load %arg9[%c0_20, %c0_21] : memref<16x128xbf16, #tpu.memory_space<vmem>>, vector<16x128xbf16>
    %cst_22 = arith.constant dense<0.000000e+00> : vector<16x128xf32>
    %33 = tpu.matmul %31, %32, %cst_22 {dimension_numbers = #tpu.dot_dimension_numbers<[1], [0], [0], [1], [0, 0, 1, 1], [], []>} : vector<16x16xbf16>, vector<16x128xbf16>, vector<16x128xf32> -> vector<16x128xf32>
    %34 = math.tanh %33 : vector<16x128xf32>
    %c0_23 = arith.constant 0 : index
    %c0_24 = arith.constant 0 : index
    %c0_25 = arith.constant 0 : index
    %35 = vector.load %arg10[%c0_23, %c0_24, %c0_25] : memref<1x16x128xf32, #tpu.memory_space<vmem>>, vector<1x16x128xf32>
    %36 = vector.shape_cast %35 : vector<1x16x128xf32> to vector<16x128xf32>
    %37 = vector.shape_cast %34 : vector<16x128xf32> to vector<1x16x128xf32>
    tpu.vector_store %arg10[%c0_23, %c0_24, %c0_25], %37 {strides = array<i32>} : memref<1x16x128xf32, #tpu.memory_space<vmem>>, vector<1x16x128xf32>,
    return
  }
  func.func @transform_0(%arg0: i32, %arg1: i32) -> (i32, i32, i32) {
    %c0_i32 = arith.constant 0 : i32
    %c0_i32_0 = arith.constant 0 : i32
    return %arg0, %arg1, %c0_i32 : i32, i32, i32
  }
  func.func @transform_1(%arg0: i32, %arg1: i32) -> (i32, i32, i32, i32) {
    %c0_i32 = arith.constant 0 : i32
    %c0_i32_0 = arith.constant 0 : i32
    %c0_i32_1 = arith.constant 0 : i32
    return %arg0, %arg1, %c0_i32, %c0_i32_0 : i32, i32, i32, i32
  }
  func.func @transform_2(%arg0: i32, %arg1: i32) -> (i32, i32, i32) {
    %c0_i32 = arith.constant 0 : i32
    %c0_i32_0 = arith.constant 0 : i32
    %c0_i32_1 = arith.constant 0 : i32
    return %arg0, %c0_i32, %c0_i32_0 : i32, i32, i32
  }
  func.func @transform_3(%arg0: i32, %arg1: i32) -> (i32, i32) {
    %c0_i32 = arith.constant 0 : i32
    %c0_i32_0 = arith.constant 0 : i32
    %c0_i32_1 = arith.constant 0 : i32
    return %c0_i32, %c0_i32_0 : i32, i32
  }
  func.func @transform_4(%arg0: i32, %arg1: i32) -> (i32, i32) {
    %c0_i32 = arith.constant 0 : i32
    %c0_i32_0 = arith.constant 0 : i32
    %c0_i32_1 = arith.constant 0 : i32
    return %c0_i32, %c0_i32_0 : i32, i32
  }
  func.func @transform_5(%arg0: i32, %arg1: i32) -> (i32, i32) {
    %c0_i32 = arith.constant 0 : i32
    %c0_i32_0 = arith.constant 0 : i32
    %c0_i32_1 = arith.constant 0 : i32
    return %c0_i32, %c0_i32_0 : i32, i32
  }
  func.func @transform_6(%arg0: i32, %arg1: i32) -> (i32, i32) {
    %c0_i32 = arith.constant 0 : i32
    %c0_i32_0 = arith.constant 0 : i32
    %c0_i32_1 = arith.constant 0 : i32
    return %c0_i32, %c0_i32_0 : i32, i32
  }
  func.func @transform_7(%arg0: i32, %arg1: i32) -> (i32, i32) {
    %c0_i32 = arith.constant 0 : i32
    %c0_i32_0 = arith.constant 0 : i32
    %c0_i32_1 = arith.constant 0 : i32
    return %c0_i32, %c0_i32_0 : i32, i32
  }
  func.func @transform_8(%arg0: i32, %arg1: i32) -> (i32, i32, i32) {
    %c0_i32 = arith.constant 0 : i32
    %c0_i32_0 = arith.constant 0 : i32
    return %arg0, %arg1, %c0_i32 : i32, i32, i32
  }
}

</mosaic_0001>

<llo_original>
// kernel: _lambda_.1
$region0: #{_lambda_.1}
  #allocation0 [shape = 'u32[]', space=smem, size = 0x4, offset = 0x4, fixed_abs, tag = 'smem constant byte address 0x4 - core index']
  #allocation1 [shape = 'u32[144,128]{1,0:T(1,128)}', space=vmem, size = 0x12000, scoped, tag = 'internal scratch']
  %s0 = inlined_call_operand.vmem [shape: bf16[2,16,128], index: 0, kind: input, shape index: {}]
  %s1 = inlined_call_operand.vmem [shape: bf16[2,1,1,128], index: 1, kind: input, shape index: {}]
  %s2 = inlined_call_operand.vmem [shape: f32[2,1,128], index: 2, kind: input, shape index: {}]
  %s3 = inlined_call_operand.hbm [shape: bf16[256,256], index: 3, kind: input, shape index: {}]
  %s4 = inlined_call_operand.vmem [shape: bf16[128,32], index: 4, kind: input, shape index: {}]
  %s5 = inlined_call_operand.vmem [shape: bf16[32,16], index: 5, kind: input, shape index: {}]
  %s6 = inlined_call_operand.vmem [shape: f32[1,16], index: 6, kind: input, shape index: {}]
  %s7 = inlined_call_operand.vmem [shape: bf16[16,128], index: 7, kind: input, shape index: {}]
  %s8 = inlined_call_operand.vmem [shape: f32[2,16,128], index: 8, kind: output, shape index: {}]
  %s9 = sld [smem:[#allocation0]]
  $region69: #{_lambda_.1} parent=0
    _
  %s11 = ssub.s32 1, %s9
  %s12 = scalar_select 0, %s11, %s9
  $region1: #{_lambda_.1} parent=0
    #allocation2 [shape = 'u8[131072]{0}', space=vmem, size = 0x20000, scoped, tag = 'input window, operand 3, single buffered']
    #allocation3 [shape = 's32[2]{0}', space=sflag, size = 0x8, scoped, tag = 'scoped memory for _lambda_.1']
    %13 = vsyncpa [#allocation3], 0
    loop: start=0, step=1, limit=4
    $region2: #{_lambda_.1} parent=1 // loop_pre_header
      _
    $region3: #{_lambda_.1} parent=1 // loop_header
      %s15 = sphi 0, %s19
      %p16 = scmp.ge.s32.totalorder %s15, 4
      %s22 = sphi 0, %s34
      %s23 = sphi 0, %s30
      %s24 = sphi 0, %s22
      %s25 = sphi 0, %s23
      %s26 = sphi 0, %s24
      %s27 = sphi 0, %s25
      %s39 = sphi 0, %s41
      %s42 = sphi 0, %s39
      %s43 = sphi 0, %s42
      %s59 = sphi 0, %s43
      %s67 = sphi 0, %s69
      %s70 = sphi 0, %s67
      %s71 = sphi 0, %s70
      %s87 = sphi 0, %s71
      %s93 = sphi 0, %s95
      %s96 = sphi 0, %s93
      %s97 = sphi 0, %s96
      %s113 = sphi 0, %s97
      %s117 = sphi 0, %s117
      %s119 = sphi 0, %s117
      %s120 = sphi 0, %s119
      %s134 = sphi 0, %s120
      %s138 = sphi 0, %s138
      %s140 = sphi 0, %s138
      %s141 = sphi 0, %s140
      %s155 = sphi 0, %s141
      %s159 = sphi 0, %s159
      %s161 = sphi 0, %s159
      %s162 = sphi 0, %s161
      %s176 = sphi 0, %s162
      %s180 = sphi 0, %s180
      %s182 = sphi 0, %s180
      %s183 = sphi 0, %s182
      %s197 = sphi 0, %s183
      %s201 = sphi 0, %s201
      %s203 = sphi 0, %s201
      %s204 = sphi 0, %s203
      %s218 = sphi 0, %s204
      %s226 = sphi 0, %s228
      %s229 = sphi 0, %s226
      %s230 = sphi 0, %s229
      %s246 = sphi 0, %s230
    $region4: #{_lambda_.1} parent=1 // loop_header_branch
      %18 = sbr.rel (%p16) target = $region8
    $region5: #{_lambda_.1} parent=1 // loop_body
      %s20 = ssub.s32 %s15, 1
      %s21 = ssub.s32 %s15, 2
      %s28 = sadd.s32 1, %s23
      %p29 = scmp.ge.s32.totalorder %s28, 1
      %s30 = scalar_select %p29, 0, %s28
      %s31 = sadd.s32 1, %s22
      %s32 = scalar_select %p29, %s31, %s22
      %p33 = scmp.ge.s32.totalorder %s32, 2
      %s34 = scalar_select %p33, 0, %s32
      %s35 = ssub.s32 %s22, %s34
      %s36 = ssub.s32 %s23, %s30
      %s37 = sor.u32 %s35, %s36
      %p38 = scmp.eq.s32.totalorder %s37, 0
      %s40 = sadd.s32 %s39, 1
      %s41 = scalar_select %p38, %s39, %s40
      %p44 = pneg %p38
      %p45 = scmp.eq.s32.totalorder %s15, 1
      %p46 = por %p44, %p45
      %p47 = scmp.ne.s32.totalorder %s39, %s42
      %p48 = scmp.eq.s32.totalorder %s15, 0
      %p49 = por %p47, %p48
      %p50 = scmp.ne.s32.totalorder %s39, %s42
      %p51 = scmp.eq.s32.totalorder %s20, 1
      %p52 = por %p50, %p51
      %p53 = scmp.ne.s32.totalorder %s42, %s43
      %p54 = scmp.eq.s32.totalorder %s20, 0
      %p55 = por %p53, %p54
      %p56 = scmp.ne.s32.totalorder %s42, %s43
      %p57 = scmp.eq.s32.totalorder %s21, 1
      %p58 = por %p56, %p57
      %p60 = scmp.ne.s32.totalorder %s43, %s59
      %p61 = scmp.eq.s32.totalorder %s21, 0
      %p62 = por %p60, %p61
      %s63 = ssub.s32 %s22, %s34
      %s64 = ssub.s32 %s23, %s30
      %s65 = sor.u32 %s63, %s64
      %p66 = scmp.eq.s32.totalorder %s65, 0
      %s68 = sadd.s32 %s67, 1
      %s69 = scalar_select %p66, %s67, %s68
      %p72 = pneg %p66
      %p73 = scmp.eq.s32.totalorder %s15, 1
      %p74 = por %p72, %p73
      %p75 = scmp.ne.s32.totalorder %s67, %s70
      %p76 = scmp.eq.s32.totalorder %s15, 0
      %p77 = por %p75, %p76
      %p78 = scmp.ne.s32.totalorder %s67, %s70
      %p79 = scmp.eq.s32.totalorder %s20, 1
      %p80 = por %p78, %p79
      %p81 = scmp.ne.s32.totalorder %s70, %s71
      %p82 = scmp.eq.s32.totalorder %s20, 0
      %p83 = por %p81, %p82
      %p84 = scmp.ne.s32.totalorder %s70, %s71
      %p85 = scmp.eq.s32.totalorder %s21, 1
      %p86 = por %p84, %p85
      %p88 = scmp.ne.s32.totalorder %s71, %s87
      %p89 = scmp.eq.s32.totalorder %s21, 0
      %p90 = por %p88, %p89
      %s91 = ssub.s32 %s22, %s34
      %p92 = scmp.eq.s32.totalorder %s91, 0
      %s94 = sadd.s32 %s93, 1
      %s95 = scalar_select %p92, %s93, %s94
      %p98 = pneg %p92
      %p99 = scmp.eq.s32.totalorder %s15, 1
      %p100 = por %p98, %p99
      %p101 = scmp.ne.s32.totalorder %s93, %s96
      %p102 = scmp.eq.s32.totalorder %s15, 0
      %p103 = por %p101, %p102
      %p104 = scmp.ne.s32.totalorder %s93, %s96
      %p105 = scmp.eq.s32.totalorder %s20, 1
      %p106 = por %p104, %p105
      %p107 = scmp.ne.s32.totalorder %s96, %s97
      %p108 = scmp.eq.s32.totalorder %s20, 0
      %p109 = por %p107, %p108
      %p110 = scmp.ne.s32.totalorder %s96, %s97
      %p111 = scmp.eq.s32.totalorder %s21, 1
      %p112 = por %p110, %p111
      %p114 = scmp.ne.s32.totalorder %s97, %s113
      %p115 = scmp.eq.s32.totalorder %s21, 0
      %p116 = por %p114, %p115
      %s118 = sadd.s32 %s117, 1
      %p121 = scmp.eq.s32.totalorder %s15, 1
      %p122 = scmp.ne.s32.totalorder %s117, %s119
      %p123 = scmp.eq.s32.totalorder %s15, 0
      %p124 = por %p122, %p123
      %p125 = scmp.ne.s32.totalorder %s117, %s119
      %p126 = scmp.eq.s32.totalorder %s20, 1
      %p127 = por %p125, %p126
      %p128 = scmp.ne.s32.totalorder %s119, %s120
      %p129 = scmp.eq.s32.totalorder %s20, 0
      %p130 = por %p128, %p129
      %p131 = scmp.ne.s32.totalorder %s119, %s120
      %p132 = scmp.eq.s32.totalorder %s21, 1
      %p133 = por %p131, %p132
      %p135 = scmp.ne.s32.totalorder %s120, %s134
      %p136 = scmp.eq.s32.totalorder %s21, 0
      %p137 = por %p135, %p136
      %s139 = sadd.s32 %s138, 1
      %p142 = scmp.eq.s32.totalorder %s15, 1
      %p143 = scmp.ne.s32.totalorder %s138, %s140
      %p144 = scmp.eq.s32.totalorder %s15, 0
      %p145 = por %p143, %p144
      %p146 = scmp.ne.s32.totalorder %s138, %s140
      %p147 = scmp.eq.s32.totalorder %s20, 1
      %p148 = por %p146, %p147
      %p149 = scmp.ne.s32.totalorder %s140, %s141
      %p150 = scmp.eq.s32.totalorder %s20, 0
      %p151 = por %p149, %p150
      %p152 = scmp.ne.s32.totalorder %s140, %s141
      %p153 = scmp.eq.s32.totalorder %s21, 1
      %p154 = por %p152, %p153
      %p156 = scmp.ne.s32.totalorder %s141, %s155
      %p157 = scmp.eq.s32.totalorder %s21, 0
      %p158 = por %p156, %p157
      %s160 = sadd.s32 %s159, 1
      %p163 = scmp.eq.s32.totalorder %s15, 1
      %p164 = scmp.ne.s32.totalorder %s159, %s161
      %p165 = scmp.eq.s32.totalorder %s15, 0
      %p166 = por %p164, %p165
      %p167 = scmp.ne.s32.totalorder %s159, %s161
      %p168 = scmp.eq.s32.totalorder %s20, 1
      %p169 = por %p167, %p168
      %p170 = scmp.ne.s32.totalorder %s161, %s162
      %p171 = scmp.eq.s32.totalorder %s20, 0
      %p172 = por %p170, %p171
      %p173 = scmp.ne.s32.totalorder %s161, %s162
      %p174 = scmp.eq.s32.totalorder %s21, 1
      %p175 = por %p173, %p174
      %p177 = scmp.ne.s32.totalorder %s162, %s176
      %p178 = scmp.eq.s32.totalorder %s21, 0
      %p179 = por %p177, %p178
      %s181 = sadd.s32 %s180, 1
      %p184 = scmp.eq.s32.totalorder %s15, 1
      %p185 = scmp.ne.s32.totalorder %s180, %s182
      %p186 = scmp.eq.s32.totalorder %s15, 0
      %p187 = por %p185, %p186
      %p188 = scmp.ne.s32.totalorder %s180, %s182
      %p189 = scmp.eq.s32.totalorder %s20, 1
      %p190 = por %p188, %p189
      %p191 = scmp.ne.s32.totalorder %s182, %s183
      %p192 = scmp.eq.s32.totalorder %s20, 0
      %p193 = por %p191, %p192
      %p194 = scmp.ne.s32.totalorder %s182, %s183
      %p195 = scmp.eq.s32.totalorder %s21, 1
      %p196 = por %p194, %p195
      %p198 = scmp.ne.s32.totalorder %s183, %s197
      %p199 = scmp.eq.s32.totalorder %s21, 0
      %p200 = por %p198, %p199
      %s202 = sadd.s32 %s201, 1
      %p205 = scmp.eq.s32.totalorder %s15, 1
      %p206 = scmp.ne.s32.totalorder %s201, %s203
      %p207 = scmp.eq.s32.totalorder %s15, 0
      %p208 = por %p206, %p207
      %p209 = scmp.ne.s32.totalorder %s201, %s203
      %p210 = scmp.eq.s32.totalorder %s20, 1
      %p211 = por %p209, %p210
      %p212 = scmp.ne.s32.totalorder %s203, %s204
      %p213 = scmp.eq.s32.totalorder %s20, 0
      %p214 = por %p212, %p213
      %p215 = scmp.ne.s32.totalorder %s203, %s204
      %p216 = scmp.eq.s32.totalorder %s21, 1
      %p217 = por %p215, %p216
      %p219 = scmp.ne.s32.totalorder %s204, %s218
      %p220 = scmp.eq.s32.totalorder %s21, 0
      %p221 = por %p219, %p220
      %s222 = ssub.s32 %s22, %s34
      %s223 = ssub.s32 %s23, %s30
      %s224 = sor.u32 %s222, %s223
      %p225 = scmp.eq.s32.totalorder %s224, 0
      %s227 = sadd.s32 %s226, 1
      %s228 = scalar_select %p225, %s226, %s227
      %p231 = pneg %p225
      %p232 = scmp.eq.s32.totalorder %s15, 1
      %p233 = por %p231, %p232
      %p234 = scmp.ne.s32.totalorder %s226, %s229
      %p235 = scmp.eq.s32.totalorder %s15, 0
      %p236 = por %p234, %p235
      %p237 = scmp.ne.s32.totalorder %s226, %s229
      %p238 = scmp.eq.s32.totalorder %s20, 1
      %p239 = por %p237, %p238
      %p240 = scmp.ne.s32.totalorder %s229, %s230
      %p241 = scmp.eq.s32.totalorder %s20, 0
      %p242 = por %p240, %p241
      %p243 = scmp.ne.s32.totalorder %s229, %s230
      %p244 = scmp.eq.s32.totalorder %s21, 1
      %p245 = por %p243, %p244
      %p247 = scmp.ne.s32.totalorder %s230, %s246
      %p248 = scmp.eq.s32.totalorder %s21, 0
      %p249 = por %p247, %p248
      %p250 = scmp.le.s32.totalorder 1, %s15
      %p251 = scmp.lt.s32.totalorder %s15, 3
      %p252 = pnand %p250, %p251
      %p253 = pneg %p252
      // Predicated region
      $region9: #{_lambda_.1} parent=5 // pred_check
        _
      $region10: #{_lambda_.1} parent=5 // pred_check_branch
        %255 = sbr.rel (%p252) target = $region12
      $region11: #{_lambda_.1} parent=5 // pred_region
        %s256 = ssub.s32 %s15, 1
        // Predicated region
        $region13: #{_lambda_.1} parent=11 // pred_check
          %p257 = pneg %p130
        $region14: #{_lambda_.1} parent=11 // pred_check_branch
          %259 = sbr.rel (%p257) target = $region16
        $region15: #{_lambda_.1} parent=11 // pred_region
          %s261 = ssub.s32 4096, 4096
          %262 = vsyncadd [#allocation3], %s261
          %s263 = sshll.u32 [#allocation2], 4
          %s264 = int_to_ptr.vmem [resolvable:$true] %s263
          %269 = dma.hbm_to_vmem [thread:$0]  %s3, 4096, %s264, [#allocation3], 128, 128, 8
        $region16: #{_lambda_.1} parent=11 // pred_fallthru
          _
        // Predicated region
        $region17: #{_lambda_.1} parent=11 // pred_check
          %p270 = pneg %p151
        $region18: #{_lambda_.1} parent=11 // pred_check_branch
          %272 = sbr.rel (%p270) target = $region20
        $region19: #{_lambda_.1} parent=11 // pred_region
          _
        $region20: #{_lambda_.1} parent=11 // pred_fallthru
          _
        // Predicated region
        $region21: #{_lambda_.1} parent=11 // pred_check
          %p273 = pneg %p172
        $region22: #{_lambda_.1} parent=11 // pred_check_branch
          %275 = sbr.rel (%p273) target = $region24
        $region23: #{_lambda_.1} parent=11 // pred_region
          _
        $region24: #{_lambda_.1} parent=11 // pred_fallthru
          _
        // Predicated region
        $region25: #{_lambda_.1} parent=11 // pred_check
          %p276 = pneg %p193
        $region26: #{_lambda_.1} parent=11 // pred_check_branch
          %278 = sbr.rel (%p276) target = $region28
        $region27: #{_lambda_.1} parent=11 // pred_region
          _
        $region28: #{_lambda_.1} parent=11 // pred_fallthru
          _
        // Predicated region
        $region29: #{_lambda_.1} parent=11 // pred_check
          %p279 = pneg %p214
        $region30: #{_lambda_.1} parent=11 // pred_check_branch
          %281 = sbr.rel (%p279) target = $region32
        $region31: #{_lambda_.1} parent=11 // pred_region
          _
        $region32: #{_lambda_.1} parent=11 // pred_fallthru
          _
      $region12: #{_lambda_.1} parent=5 // pred_fallthru
        _
      %p282 = scmp.lt.s32.totalorder %s15, 2
      // Predicated region
      $region33: #{_lambda_.1} parent=5 // pred_check
        %p283 = pneg %p282
      $region34: #{_lambda_.1} parent=5 // pred_check_branch
        %285 = sbr.rel (%p283) target = $region36
      $region35: #{_lambda_.1} parent=5 // pred_region
        // Predicated region
        $region37: #{_lambda_.1} parent=35 // pred_check
          %p286 = pneg %p49
        $region38: #{_lambda_.1} parent=35 // pred_check_branch
          %288 = sbr.rel (%p286) target = $region40
        $region39: #{_lambda_.1} parent=35 // pred_region
          %s289 = smul.u32 2, %s23
          %p290 = scmp.lt.s32.totalorder %s22, 1
          %s291 = scalar_select %p290, %s22, 1
          %p292 = scmp.lt.s32.totalorder %s289, 1
          %s293 = scalar_select %p292, %s289, 1
          %s294 = smul.addr %s291, 2
          %s295 = sadd.s32 %s293, %s294
          %s296 = smul.addr %s295, 4
          %s297 = scalar_lea.vmem %s0, %s296
          %s298 = smul.u32 2, %s23
        $region40: #{_lambda_.1} parent=35 // pred_fallthru
          _
        // Predicated region
        $region41: #{_lambda_.1} parent=35 // pred_check
          %p299 = pneg %p77
        $region42: #{_lambda_.1} parent=35 // pred_check_branch
          %301 = sbr.rel (%p299) target = $region44
        $region43: #{_lambda_.1} parent=35 // pred_region
          %p302 = scmp.lt.s32.totalorder %s22, 1
          %s303 = scalar_select %p302, %s22, 1
          %p304 = scmp.lt.s32.totalorder %s23, 0
          %s305 = scalar_select %p304, %s23, 0
          %s306 = sadd.s32 %s305, %s303
          %s307 = scalar_lea.vmem %s1, %s306
        $region44: #{_lambda_.1} parent=35 // pred_fallthru
          _
        // Predicated region
        $region45: #{_lambda_.1} parent=35 // pred_check
          %p308 = pneg %p103
        $region46: #{_lambda_.1} parent=35 // pred_check_branch
          %310 = sbr.rel (%p308) target = $region48
        $region47: #{_lambda_.1} parent=35 // pred_region
          %p311 = scmp.lt.s32.totalorder %s22, 1
          %s312 = scalar_select %p311, %s22, 1
          %s313 = scalar_lea.vmem %s2, %s312
        $region48: #{_lambda_.1} parent=35 // pred_fallthru
          _
      $region36: #{_lambda_.1} parent=5 // pred_fallthru
        _
      %p314 = scmp.le.s32.totalorder 1, %s15
      %p315 = scmp.lt.s32.totalorder %s15, 3
      %p316 = pnand %p314, %p315
      %p317 = pneg %p316
      // Predicated region
      $region49: #{_lambda_.1} parent=5 // pred_check
        _
      $region50: #{_lambda_.1} parent=5 // pred_check_branch
        %319 = sbr.rel (%p316) target = $region52
      $region51: #{_lambda_.1} parent=5 // pred_region
        %s320 = ssub.s32 %s15, 1
        // Predicated region
        $region53: #{_lambda_.1} parent=51 // pred_check
          %p321 = pneg %p130
        $region54: #{_lambda_.1} parent=51 // pred_check_branch
          %323 = sbr.rel (%p321) target = $region56
        $region55: #{_lambda_.1} parent=51 // pred_region
          %324 = dma.done [#allocation3], 4096
        $region56: #{_lambda_.1} parent=51 // pred_fallthru
          _
        %s325 = smul.u32 2, %s25
        %p326 = scmp.lt.s32.totalorder %s24, 1
        %s327 = scalar_select %p326, %s24, 1
        %p328 = scmp.lt.s32.totalorder %s325, 1
        %s329 = scalar_select %p328, %s325, 1
        %s330 = smul.addr %s327, 2
        %s331 = sadd.s32 %s329, %s330
        %s332 = smul.addr %s331, 4
        %s333 = scalar_lea.vmem %s0, %s332
        %p334 = pneg %p55
        %p335 = pneg %p52
        %p336 = scmp.lt.s32.totalorder %s24, 1
        %s337 = scalar_select %p336, %s24, 1
        %p338 = scmp.lt.s32.totalorder %s25, 0
        %s339 = scalar_select %p338, %s25, 0
        %s340 = sadd.s32 %s339, %s337
        %s341 = scalar_lea.vmem %s1, %s340
        %p342 = pneg %p83
        %p343 = pneg %p80
        %p344 = scmp.lt.s32.totalorder %s24, 1
        %s345 = scalar_select %p344, %s24, 1
        %s346 = scalar_lea.vmem %s2, %s345
        %p347 = pneg %p109
        %p348 = pneg %p106
        %p349 = pneg %p130
        %p350 = pneg %p127
        %p351 = pneg %p151
        %p352 = pneg %p148
        %p353 = pneg %p172
        %p354 = pneg %p169
        %p355 = pneg %p193
        %p356 = pneg %p190
        %p357 = pneg %p214
        %p358 = pneg %p211
        %p359 = pneg %p242
        %p360 = pneg %p239
        %s361 = smul.u32 2, %s25
        %p362 = scmp.lt.s32.totalorder %s24, 1
        %s363 = scalar_select %p362, %s24, 1
        %p364 = scmp.lt.s32.totalorder %s361, 1
        %s365 = scalar_select %p364, %s361, 1
        %s366 = smul.addr %s363, 2
        %s367 = sadd.s32 %s365, %s366
        %s368 = smul.addr %s367, 8
        %s369 = scalar_lea.vmem %s8, %s368
        %s370 = smul.u32 2, %s25
        %p371 = scmp.lt.s32.totalorder %s24, 1
        %s372 = scalar_select %p371, %s24, 1
        %p373 = scmp.lt.s32.totalorder %s370, 1
        %s374 = scalar_select %p373, %s370, 1
        %s375 = smul.addr %s372, 2
        %s376 = sadd.s32 %s374, %s375
        %s377 = smul.addr %s376, 4
        %s378 = scalar_lea.vmem %s0, %s377
        %s379 = smul.u32 2, %s25
        %p380 = scmp.lt.s32.totalorder %s24, 1
        %s381 = scalar_select %p380, %s24, 1
        %p382 = scmp.lt.s32.totalorder %s25, 0
        %s383 = scalar_select %p382, %s25, 0
        %s384 = sadd.s32 %s383, %s381
        %s385 = scalar_lea.vmem %s1, %s384
        %p386 = scmp.lt.s32.totalorder %s24, 1
        %s387 = scalar_select %p386, %s24, 1
        %s388 = scalar_lea.vmem %s2, %s387
        %s389 = smul.u32 2, %s25
        %p390 = scmp.lt.s32.totalorder %s24, 1
        %s391 = scalar_select %p390, %s24, 1
        %p392 = scmp.lt.s32.totalorder %s389, 1
        %s393 = scalar_select %p392, %s389, 1
        %s394 = smul.addr %s391, 2
        %s395 = sadd.s32 %s393, %s394
        %s396 = smul.addr %s395, 8
        %s397 = scalar_lea.vmem %s8, %s396
        %s398 = smul.u32 2, %s25
        %v400 = vld [vmem:[%s378] sm:$0xf]
        %v401 = vld [vmem:[%s378 + $0x4] sm:$0xf]
        %v402 = vld [vmem:[%s385] sm:$0x1]
        %v405 = vunpack.c.l.b16 %v400
        %v406 = vunpack.c.l.b16 %v401
        %v407 = vpack.c.b16 %v406, %v405
        %v409 = vshrl.u32 %v407, 16
        %v411 = vrot.slane %v409, 7
        %v412 = vshll.u32 %v407, 16
        %v414 = vor.u32 %v411, %v412
        %vm416 = vcmask 1040384
        %vm417 = vsmask.f32 256
        %vm418 = vmand %vm416, %vm417
        %v419 = vsel %vm418, %v402, %v414
        %v421 = vld [vmem:[#allocation2] sm:$0xff]
        %v422 = vld [vmem:[#allocation2 + $0x8] sm:$0xff]
        %v423 = vld [vmem:[#allocation2 + $0x10] sm:$0xff]
        %v424 = vld [vmem:[#allocation2 + $0x18] sm:$0xff]
        %v425 = vld [vmem:[#allocation2 + $0x20] sm:$0xff]
        %v426 = vld [vmem:[#allocation2 + $0x28] sm:$0xff]
        %v427 = vld [vmem:[#allocation2 + $0x30] sm:$0xff]
        %v428 = vld [vmem:[#allocation2 + $0x38] sm:$0xff]
        %v429 = vld [vmem:[#allocation2 + $0x40] sm:$0xff]
        %v430 = vld [vmem:[#allocation2 + $0x48] sm:$0xff]
        %v431 = vld [vmem:[#allocation2 + $0x50] sm:$0xff]
        %v432 = vld [vmem:[#allocation2 + $0x58] sm:$0xff]
        %v433 = vld [vmem:[#allocation2 + $0x60] sm:$0xff]
        %v434 = vld [vmem:[#allocation2 + $0x68] sm:$0xff]
        %v435 = vld [vmem:[#allocation2 + $0x70] sm:$0xff]
        %v436 = vld [vmem:[#allocation2 + $0x78] sm:$0xff]
        %v437 = vld [vmem:[#allocation2 + $0x80] sm:$0xff]
        %v438 = vld [vmem:[#allocation2 + $0x88] sm:$0xff]
        %v439 = vld [vmem:[#allocation2 + $0x90] sm:$0xff]
        %v440 = vld [vmem:[#allocation2 + $0x98] sm:$0xff]
        %v441 = vld [vmem:[#allocation2 + $0xa0] sm:$0xff]
        %v442 = vld [vmem:[#allocation2 + $0xa8] sm:$0xff]
        %v443 = vld [vmem:[#allocation2 + $0xb0] sm:$0xff]
        %v444 = vld [vmem:[#allocation2 + $0xb8] sm:$0xff]
        %v445 = vld [vmem:[#allocation2 + $0xc0] sm:$0xff]
        %v446 = vld [vmem:[#allocation2 + $0xc8] sm:$0xff]
        %v447 = vld [vmem:[#allocation2 + $0xd0] sm:$0xff]
        %v448 = vld [vmem:[#allocation2 + $0xd8] sm:$0xff]
        %v449 = vld [vmem:[#allocation2 + $0xe0] sm:$0xff]
        %v450 = vld [vmem:[#allocation2 + $0xe8] sm:$0xff]
        %v451 = vld [vmem:[#allocation2 + $0xf0] sm:$0xff]
        %v452 = vld [vmem:[#allocation2 + $0xf8] sm:$0xff]
        %v485 = vunpack.c.l.b16 %v421
        %v486 = vunpack.c.h.b16 %v421
        %v487 = vunpack.c.l.b16 %v422
        %v488 = vunpack.c.h.b16 %v422
        %v489 = vunpack.c.l.b16 %v423
        %v490 = vunpack.c.h.b16 %v423
        %v491 = vunpack.c.l.b16 %v424
        %v492 = vunpack.c.h.b16 %v424
        %v493 = vunpack.c.l.b16 %v425
        %v494 = vunpack.c.h.b16 %v425
        %v495 = vunpack.c.l.b16 %v426
        %v496 = vunpack.c.h.b16 %v426
        %v497 = vunpack.c.l.b16 %v427
        %v498 = vunpack.c.h.b16 %v427
        %v499 = vunpack.c.l.b16 %v428
        %v500 = vunpack.c.h.b16 %v428
        %v501 = vunpack.c.l.b16 %v429
        %v502 = vunpack.c.h.b16 %v429
        %v503 = vunpack.c.l.b16 %v430
        %v504 = vunpack.c.h.b16 %v430
        %v505 = vunpack.c.l.b16 %v431
        %v506 = vunpack.c.h.b16 %v431
        %v507 = vunpack.c.l.b16 %v432
        %v508 = vunpack.c.h.b16 %v432
        %v509 = vunpack.c.l.b16 %v433
        %v510 = vunpack.c.h.b16 %v433
        %v511 = vunpack.c.l.b16 %v434
        %v512 = vunpack.c.h.b16 %v434
        %v513 = vunpack.c.l.b16 %v435
        %v514 = vunpack.c.h.b16 %v435
        %v515 = vunpack.c.l.b16 %v436
        %v516 = vunpack.c.h.b16 %v436
        %v517 = vunpack.c.l.b16 %v437
        %v518 = vunpack.c.h.b16 %v437
        %v519 = vunpack.c.l.b16 %v438
        %v520 = vunpack.c.h.b16 %v438
        %v521 = vunpack.c.l.b16 %v439
        %v522 = vunpack.c.h.b16 %v439
        %v523 = vunpack.c.l.b16 %v440
        %v524 = vunpack.c.h.b16 %v440
        %v525 = vunpack.c.l.b16 %v441
        %v526 = vunpack.c.h.b16 %v441
        %v527 = vunpack.c.l.b16 %v442
        %v528 = vunpack.c.h.b16 %v442
        %v529 = vunpack.c.l.b16 %v443
        %v530 = vunpack.c.h.b16 %v443
        %v531 = vunpack.c.l.b16 %v444
        %v532 = vunpack.c.h.b16 %v444
        %v533 = vunpack.c.l.b16 %v445
        %v534 = vunpack.c.h.b16 %v445
        %v535 = vunpack.c.l.b16 %v446
        %v536 = vunpack.c.h.b16 %v446
        %v537 = vunpack.c.l.b16 %v447
        %v538 = vunpack.c.h.b16 %v447
        %v539 = vunpack.c.l.b16 %v448
        %v540 = vunpack.c.h.b16 %v448
        %v541 = vunpack.c.l.b16 %v449
        %v542 = vunpack.c.h.b16 %v449
        %v543 = vunpack.c.l.b16 %v450
        %v544 = vunpack.c.h.b16 %v450
        %v545 = vunpack.c.l.b16 %v451
        %v546 = vunpack.c.h.b16 %v451
        %v547 = vunpack.c.l.b16 %v452
        %v548 = vunpack.c.h.b16 %v452
        %v549 = vpack.c.b16 %v487, %v485
        %v550 = vpack.c.b16 %v488, %v486
        %v551 = vpack.c.b16 %v491, %v489
        %v552 = vpack.c.b16 %v492, %v490
        %v553 = vpack.c.b16 %v495, %v493
        %v554 = vpack.c.b16 %v496, %v494
        %v555 = vpack.c.b16 %v499, %v497
        %v556 = vpack.c.b16 %v500, %v498
        %v557 = vpack.c.b16 %v503, %v501
        %v558 = vpack.c.b16 %v504, %v502
        %v559 = vpack.c.b16 %v507, %v505
        %v560 = vpack.c.b16 %v508, %v506
        %v561 = vpack.c.b16 %v511, %v509
        %v562 = vpack.c.b16 %v512, %v510
        %v563 = vpack.c.b16 %v515, %v513
        %v564 = vpack.c.b16 %v516, %v514
        %v565 = vpack.c.b16 %v519, %v517
        %v566 = vpack.c.b16 %v520, %v518
        %v567 = vpack.c.b16 %v523, %v521
        %v568 = vpack.c.b16 %v524, %v522
        %v569 = vpack.c.b16 %v527, %v525
        %v570 = vpack.c.b16 %v528, %v526
        %v571 = vpack.c.b16 %v531, %v529
        %v572 = vpack.c.b16 %v532, %v530
        %v573 = vpack.c.b16 %v535, %v533
        %v574 = vpack.c.b16 %v536, %v534
        %v575 = vpack.c.b16 %v539, %v537
        %v576 = vpack.c.b16 %v540, %v538
        %v577 = vpack.c.b16 %v543, %v541
        %v578 = vpack.c.b16 %v544, %v542
        %v579 = vpack.c.b16 %v547, %v545
        %v580 = vpack.c.b16 %v548, %v546
        %613 = vmatprep.subr.bf16.mxu0 %v550
        %614 = vmatpush1.bf16.msra.mxu0 %v549
        %615 = vmatprep.subr.bf16.mxu0 %v552
        %616 = vmatpush1.bf16.msra.mxu0 %v551
        %617 = vmatprep.subr.bf16.mxu0 %v554
        %618 = vmatpush1.bf16.msra.mxu0 %v553
        %619 = vmatprep.subr.bf16.mxu0 %v556
        %620 = vmatpush1.bf16.msra.mxu0 %v555
        %621 = vmatprep.subr.bf16.mxu0 %v558
        %622 = vmatpush1.bf16.msra.mxu0 %v557
        %623 = vmatprep.subr.bf16.mxu0 %v560
        %624 = vmatpush1.bf16.msra.mxu0 %v559
        %625 = vmatprep.subr.bf16.mxu0 %v562
        %626 = vmatpush1.bf16.msra.mxu0 %v561
        %627 = vmatprep.subr.bf16.mxu0 %v564
        %628 = vmatpush1.bf16.msra.mxu0 %v563
        %629 = vmatprep.subr.bf16.mxu0 %v566
        %630 = vmatpush1.bf16.msra.mxu0 %v565
        %631 = vmatprep.subr.bf16.mxu0 %v568
        %632 = vmatpush1.bf16.msra.mxu0 %v567
        %633 = vmatprep.subr.bf16.mxu0 %v570
        %634 = vmatpush1.bf16.msra.mxu0 %v569
        %635 = vmatprep.subr.bf16.mxu0 %v572
        %636 = vmatpush1.bf16.msra.mxu0 %v571
        %637 = vmatprep.subr.bf16.mxu0 %v574
        %638 = vmatpush1.bf16.msra.mxu0 %v573
        %639 = vmatprep.subr.bf16.mxu0 %v576
        %640 = vmatpush1.bf16.msra.mxu0 %v575
        %641 = vmatprep.subr.bf16.mxu0 %v578
        %642 = vmatpush1.bf16.msra.mxu0 %v577
        %643 = vmatprep.subr.bf16.mxu0 %v580
        %644 = vmatpush1.bf16.msra.mxu0 %v579
        %645 = vmatprep.mubr.bf16.mxu0 %v407
        %646 = vmatmul.mubr.bf16.gmra.mrb[0].mxu0 %v419
        %v647 = vpop.f32.mrb[0].mxu0
        %v648 = vadd.f32 0.0, %v647
        %v649 = vpop.f32.mrb[0].mxu0
        %v650 = vadd.f32 0.0, %v649
        %v651 = vpop.f32.mrb[0].mxu0
        %v652 = vadd.f32 0.0, %v651
        %v653 = vpop.f32.mrb[0].mxu0
        %v654 = vadd.f32 0.0, %v653
        %655 = vdwg.mxu0
        %v656 = vmul.f32 %v648, %v648
        %v657 = vmul.f32 %v652, %v652
        %v658 = vmul.f32 %v650, %v650
        %v659 = vmul.f32 %v654, %v654
        %v660 = vadd.f32 %v656, %v658
        %v661 = vadd.f32 %v657, %v659
        %v662 = vld [vmem:[%s388] sm:$0x1]
        %v664 = vlaneseq
        %v665 = vshrl.u32 %v664, 7
        %v666 = vsub.s32 0, %v665
        %v667 = vrot.slane %v662, %v666
        %v669 = vmul.f32 %v660, %v667
        %v670 = vmul.f32 %v661, %v667
        %v671 = vpack.c.bf16 %v670, %v669
        %v672 = vld [vmem:[%s4] sm:$0xf]
        %v673 = vld [vmem:[%s4 + $0x4] sm:$0xf]
        %v674 = vld [vmem:[%s4 + $0x8] sm:$0xf]
        %v675 = vld [vmem:[%s4 + $0xc] sm:$0xf]
        %v676 = vld [vmem:[%s4 + $0x10] sm:$0xf]
        %v677 = vld [vmem:[%s4 + $0x14] sm:$0xf]
        %v678 = vld [vmem:[%s4 + $0x18] sm:$0xf]
        %v679 = vld [vmem:[%s4 + $0x1c] sm:$0xf]
        %v680 = vld [vmem:[%s4 + $0x20] sm:$0xf]
        %v681 = vld [vmem:[%s4 + $0x24] sm:$0xf]
        %v682 = vld [vmem:[%s4 + $0x28] sm:$0xf]
        %v683 = vld [vmem:[%s4 + $0x2c] sm:$0xf]
        %v684 = vld [vmem:[%s4 + $0x30] sm:$0xf]
        %v685 = vld [vmem:[%s4 + $0x34] sm:$0xf]
        %v686 = vld [vmem:[%s4 + $0x38] sm:$0xf]
        %v687 = vld [vmem:[%s4 + $0x3c] sm:$0xf]
        %v704 = vunpack.c.l.b16 %v672
        %v705 = vunpack.c.l.b16 %v673
        %v706 = vunpack.c.l.b16 %v674
        %v707 = vunpack.c.l.b16 %v675
        %v708 = vunpack.c.l.b16 %v676
        %v709 = vunpack.c.l.b16 %v677
        %v710 = vunpack.c.l.b16 %v678
        %v711 = vunpack.c.l.b16 %v679
        %v712 = vunpack.c.l.b16 %v680
        %v713 = vunpack.c.l.b16 %v681
        %v714 = vunpack.c.l.b16 %v682
        %v715 = vunpack.c.l.b16 %v683
        %v716 = vunpack.c.l.b16 %v684
        %v717 = vunpack.c.l.b16 %v685
        %v718 = vunpack.c.l.b16 %v686
        %v719 = vunpack.c.l.b16 %v687
        %v720 = vpack.c.b16 %v705, %v704
        %v721 = vpack.c.b16 %v707, %v706
        %v722 = vpack.c.b16 %v709, %v708
        %v723 = vpack.c.b16 %v711, %v710
        %v724 = vpack.c.b16 %v713, %v712
        %v725 = vpack.c.b16 %v715, %v714
        %v726 = vpack.c.b16 %v717, %v716
        %v727 = vpack.c.b16 %v719, %v718
        %736 = vmatprep.subr.bf16.mxu0 0
        %737 = vmatpush1.bf16.msra.mxu0 %v720
        %738 = vmatprep.subr.bf16.mxu0 0
        %739 = vmatpush1.bf16.msra.mxu0 %v721
        %740 = vmatprep.subr.bf16.mxu0 0
        %741 = vmatpush1.bf16.msra.mxu0 %v722
        %742 = vmatprep.subr.bf16.mxu0 0
        %743 = vmatpush1.bf16.msra.mxu0 %v723
        %744 = vmatprep.subr.bf16.mxu0 0
        %745 = vmatpush1.bf16.msra.mxu0 %v724
        %746 = vmatprep.subr.bf16.mxu0 0
        %747 = vmatpush1.bf16.msra.mxu0 %v725
        %748 = vmatprep.subr.bf16.mxu0 0
        %749 = vmatpush1.bf16.msra.mxu0 %v726
        %750 = vmatprep.subr.bf16.mxu0 0
        %751 = vmatpush1.bf16.msra.mxu0 %v727
        %752 = vmatprep.subr.bf16.mxu0 0
        %753 = vmatpush1.bf16.msra.mxu0 0
        %754 = vmatprep.subr.bf16.mxu0 0
        %755 = vmatpush1.bf16.msra.mxu0 0
        %756 = vmatprep.subr.bf16.mxu0 0
        %757 = vmatpush1.bf16.msra.mxu0 0
        %758 = vmatprep.subr.bf16.mxu0 0
        %759 = vmatpush1.bf16.msra.mxu0 0
        %760 = vmatprep.subr.bf16.mxu0 0
        %761 = vmatpush1.bf16.msra.mxu0 0
        %762 = vmatprep.subr.bf16.mxu0 0
        %763 = vmatpush1.bf16.msra.mxu0 0
        %764 = vmatprep.subr.bf16.mxu0 0
        %765 = vmatpush1.bf16.msra.mxu0 0
        %766 = vmatprep.subr.bf16.mxu0 0
        %767 = vmatpush1.bf16.msra.mxu0 0
        %768 = vmatprep.mubr.bf16.mxu0 0
        %769 = vmatmul.mubr.bf16.gmra.mrb[0].mxu0 %v671
        %v770 = vpop.f32.mrb[0].mxu0
        %v771 = vadd.f32 1e-05, %v770
        %v772 = vpop.f32.mrb[0].mxu0
        %v773 = vpop.f32.mrb[0].mxu0
        %v774 = vadd.f32 1e-05, %v773
        %v775 = vpop.f32.mrb[0].mxu0
        %776 = vdwg.mxu0
        %v777 = vlog2.pop %v771
        %v778 = vmul.f32 %v777, 0.6931472
        %v779 = vlog2.pop %v774
        %v780 = vmul.f32 %v779, 0.6931472
        %v781 = vpack.c.bf16 %v780, %v778
        %v782 = vld [vmem:[%s5] sm:$0xf]
        %v783 = vld [vmem:[%s5 + $0x4] sm:$0xf]
        %v784 = vld [vmem:[%s5 + $0x8] sm:$0xf]
        %v785 = vld [vmem:[%s5 + $0xc] sm:$0xf]
        %v786 = vld [vmem:[%s6] sm:$0x1]
        %v788 = vlaneseq
        %v789 = vshrl.u32 %v788, 7
        %v790 = vsub.s32 0, %v789
        %v791 = vrot.slane %v786, %v790
        %v797 = vunpack.c.l.b16 %v782
        %v798 = vunpack.c.l.b16 %v783
        %v799 = vunpack.c.l.b16 %v784
        %v800 = vunpack.c.l.b16 %v785
        %v801 = vpack.c.b16 %v798, %v797
        %v802 = vpack.c.b16 %v800, %v799
        %vm805 = vcmask 261120
        %v807 = vsel %vm805, %v781, 0
        %809 = vmatprep.subr.bf16.mxu0 0
        %810 = vmatpush1.bf16.msra.mxu0 %v801
        %811 = vmatprep.subr.bf16.mxu0 0
        %812 = vmatpush1.bf16.msra.mxu0 %v802
        %813 = vmatprep.subr.bf16.mxu0 0
        %814 = vmatpush1.bf16.msra.mxu0 0
        %815 = vmatprep.subr.bf16.mxu0 0
        %816 = vmatpush1.bf16.msra.mxu0 0
        %817 = vmatprep.subr.bf16.mxu0 0
        %818 = vmatpush1.bf16.msra.mxu0 0
        %819 = vmatprep.subr.bf16.mxu0 0
        %820 = vmatpush1.bf16.msra.mxu0 0
        %821 = vmatprep.subr.bf16.mxu0 0
        %822 = vmatpush1.bf16.msra.mxu0 0
        %823 = vmatprep.subr.bf16.mxu0 0
        %824 = vmatpush1.bf16.msra.mxu0 0
        %825 = vmatprep.subr.bf16.mxu0 0
        %826 = vmatpush1.bf16.msra.mxu0 0
        %827 = vmatprep.subr.bf16.mxu0 0
        %828 = vmatpush1.bf16.msra.mxu0 0
        %829 = vmatprep.subr.bf16.mxu0 0
        %830 = vmatpush1.bf16.msra.mxu0 0
        %831 = vmatprep.subr.bf16.mxu0 0
        %832 = vmatpush1.bf16.msra.mxu0 0
        %833 = vmatprep.subr.bf16.mxu0 0
        %834 = vmatpush1.bf16.msra.mxu0 0
        %835 = vmatprep.subr.bf16.mxu0 0
        %836 = vmatpush1.bf16.msra.mxu0 0
        %837 = vmatprep.subr.bf16.mxu0 0
        %838 = vmatpush1.bf16.msra.mxu0 0
        %839 = vmatprep.subr.bf16.mxu0 0
        %840 = vmatpush1.bf16.msra.mxu0 0
        %841 = vmatprep.mubr.bf16.mxu0 0
        %842 = vmatmul.mubr.bf16.gmra.mrb[0].mxu0 %v807
        %v843 = vpop.f32.mrb[0].mxu0
        %v844 = vadd.f32 %v791, %v843
        %v845 = vpop.f32.mrb[0].mxu0
        %v846 = vpop.f32.mrb[0].mxu0
        %v847 = vadd.f32 %v791, %v846
        %v848 = vpop.f32.mrb[0].mxu0
        %849 = vdwg.mxu0
        %v850 = vtanh.pop %v844
        %v851 = vtanh.pop %v847
        %v852 = vpack.c.bf16 %v851, %v850
        %v853 = vld [vmem:[%s7] sm:$0xf]
        %v854 = vld [vmem:[%s7 + $0x4] sm:$0xf]
        %v857 = vunpack.c.l.b16 %v853
        %v858 = vunpack.c.l.b16 %v854
        %v859 = vpack.c.b16 %v858, %v857
        %vm861 = vcmask 130048
        %v863 = vsel %vm861, %v852, 0
        %865 = vmatprep.subr.bf16.mxu0 0
        %866 = vmatpush1.bf16.msra.mxu0 %v859
        %867 = vmatprep.subr.bf16.mxu0 0
        %868 = vmatpush1.bf16.msra.mxu0 0
        %869 = vmatprep.subr.bf16.mxu0 0
        %870 = vmatpush1.bf16.msra.mxu0 0
        %871 = vmatprep.subr.bf16.mxu0 0
        %872 = vmatpush1.bf16.msra.mxu0 0
        %873 = vmatprep.subr.bf16.mxu0 0
        %874 = vmatpush1.bf16.msra.mxu0 0
        %875 = vmatprep.subr.bf16.mxu0 0
        %876 = vmatpush1.bf16.msra.mxu0 0
        %877 = vmatprep.subr.bf16.mxu0 0
        %878 = vmatpush1.bf16.msra.mxu0 0
        %879 = vmatprep.subr.bf16.mxu0 0
        %880 = vmatpush1.bf16.msra.mxu0 0
        %881 = vmatprep.subr.bf16.mxu0 0
        %882 = vmatpush1.bf16.msra.mxu0 0
        %883 = vmatprep.subr.bf16.mxu0 0
        %884 = vmatpush1.bf16.msra.mxu0 0
        %885 = vmatprep.subr.bf16.mxu0 0
        %886 = vmatpush1.bf16.msra.mxu0 0
        %887 = vmatprep.subr.bf16.mxu0 0
        %888 = vmatpush1.bf16.msra.mxu0 0
        %889 = vmatprep.subr.bf16.mxu0 0
        %890 = vmatpush1.bf16.msra.mxu0 0
        %891 = vmatprep.subr.bf16.mxu0 0
        %892 = vmatpush1.bf16.msra.mxu0 0
        %893 = vmatprep.subr.bf16.mxu0 0
        %894 = vmatpush1.bf16.msra.mxu0 0
        %895 = vmatprep.subr.bf16.mxu0 0
        %896 = vmatpush1.bf16.msra.mxu0 0
        %897 = vmatprep.mubr.bf16.mxu0 0
        %898 = vmatmul.mubr.bf16.gmra.mrb[0].mxu0 %v863
        %v899 = vpop.f32.mrb[0].mxu0
        %v900 = vadd.f32 0.0, %v899
        %v901 = vpop.f32.mrb[0].mxu0
        %v902 = vpop.f32.mrb[0].mxu0
        %v903 = vadd.f32 0.0, %v902
        %v904 = vpop.f32.mrb[0].mxu0
        %905 = vdwg.mxu0
        %v906 = vtanh.pop %v900
        %v907 = vtanh.pop %v903
        %908 = vst [vmem:[%s397] sm:$0xff] %v906
        %909 = vst [vmem:[%s397 + $0x8] sm:$0xff] %v907
        %s910 = smul.u32 2, %s25
        %p911 = scmp.lt.s32.totalorder %s24, 1
        %s912 = scalar_select %p911, %s24, 1
        %p913 = scmp.lt.s32.totalorder %s910, 1
        %s914 = scalar_select %p913, %s910, 1
        %s915 = smul.addr %s912, 2
        %s916 = sadd.s32 %s914, %s915
        %s917 = smul.addr %s916, 8
        %s918 = scalar_lea.vmem %s8, %s917
        // Predicated region
        $region57: #{_lambda_.1} parent=51 // pred_check
          %p919 = pneg %p239
        $region58: #{_lambda_.1} parent=51 // pred_check_branch
          %921 = sbr.rel (%p919) target = $region60
        $region59: #{_lambda_.1} parent=51 // pred_region
          %s922 = smul.u32 2, %s25
        $region60: #{_lambda_.1} parent=51 // pred_fallthru
          _
      $region52: #{_lambda_.1} parent=5 // pred_fallthru
        _
      %p923 = scmp.le.s32.totalorder 2, %s15
      // Predicated region
      $region61: #{_lambda_.1} parent=5 // pred_check
        %p924 = pneg %p923
      $region62: #{_lambda_.1} parent=5 // pred_check_branch
        %926 = sbr.rel (%p924) target = $region64
      $region63: #{_lambda_.1} parent=5 // pred_region
        %s927 = ssub.s32 %s15, 2
        // Predicated region
        $region65: #{_lambda_.1} parent=63 // pred_check
          %p928 = pneg %p245
        $region66: #{_lambda_.1} parent=63 // pred_check_branch
          %930 = sbr.rel (%p928) target = $region68
        $region67: #{_lambda_.1} parent=63 // pred_region
          %s931 = smul.u32 2, %s27
          %p932 = scmp.lt.s32.totalorder %s26, 1
          %s933 = scalar_select %p932, %s26, 1
          %p934 = scmp.lt.s32.totalorder %s931, 1
          %s935 = scalar_select %p934, %s931, 1
          %s936 = smul.addr %s933, 2
          %s937 = sadd.s32 %s935, %s936
          %s938 = smul.addr %s937, 8
          %s939 = scalar_lea.vmem %s8, %s938
        $region68: #{_lambda_.1} parent=63 // pred_fallthru
          _
      $region64: #{_lambda_.1} parent=5 // pred_fallthru
        _
    $region6: #{_lambda_.1} parent=1 // loop_footer
      %s19 = sadd.s32 1, %s15
    $region7: #{_lambda_.1} parent=1 // loop_footer_branch
      %14 = sbr.rel target = $region3
    $region8: #{_lambda_.1} parent=1 // loop_exit
      _
    %940 = vsyncpa [#allocation3], 1
    %s941 = scalar_lea.sflag [#allocation3], 1
    %942 = vsyncpa %s941, 1

</llo_original>
